<compile_context>
chip_gen: v5e
topology: v5e:2x2
jax: 0.10.0
libtpu: 0.0.40
codegen_flags: <defaults>
</compile_context>

<pallas_src>
import functools

import jax
import jax.numpy as jnp
from jax.experimental import pallas as pl
from jax.experimental.pallas import tpu as pltpu


def _round_up(x, m):
    return (x + m - 1) // m * m


def _vmem_limit_bytes():
    """Generation-aware scoped-VMEM limit (v7x: 64 MiB/TC, v5e/v6e: 128 MiB)."""
    try:
        cap = int(pltpu.get_tpu_info().vmem_capacity_bytes)
    except Exception:
        cap = 64 * 1024 * 1024          # conservative fallback: assume v7x-sized VMEM
    return min(cap - 8 * 1024 * 1024, 100 * 1024 * 1024)


# ----------------------------------------------------------------------------
# Fused multi-layer GCN kernel, grid = (num_layers, num_row_tiles)
# ----------------------------------------------------------------------------
def _fused_gcn_kernel(adj_ref, x_ref, d_ref, w_ref, b_ref, out_ref,
                      h_ref, s_ref, copy_sem, *, tm, adj_resident):
    """Refs:
      adj_ref : int8/bf16 adjacency (resident: (n_pad,n_pad); streaming: (tm,n_pad))
      x_ref   : bf16 (n_pad, fp) d-scaled padded features, raw ref (memory_space=ANY)
      d_ref   : f32  (tm, 1)     row tile of d = rsqrt(deg+1)   (0 on padded rows)
      w_ref   : bf16 (fp, fp)    this layer's weight
      b_ref   : f32  (1, fp)     this layer's bias
      out_ref : f32  (tm, fp)    output row tile (stored at the last layer only)
      h_ref   : bf16 (n_pad, fp) VMEM scratch, resident scaled activations h~ = d ⊙ h
      s_ref   : bf16 (n_pad, fp) VMEM scratch, per-layer support s' = h~ @ W_l
    """
    layer = pl.program_id(0)
    row = pl.program_id(1)
    num_layers = pl.num_programs(0)

    # One-time HBM -> VMEM DMA of the (already d-scaled, zero-padded) node features
    # into the resident activation buffer (instead of a pinned full-array VMEM input).
    @pl.when((layer == 0) & (row == 0))
    def _init_h():
        cp = pltpu.make_async_copy(x_ref, h_ref, copy_sem)
        cp.start()
        cp.wait()

    # Per-layer prologue (row tile 0): s' = h~ @ W_l on the MXU, stored once as bf16.
    # Because h~ is already row-scaled by d, this equals d ⊙ (h @ W_l).
    @pl.when(row == 0)
    def _layer_prologue():
        s_ref[...] = jnp.dot(
            h_ref[...], w_ref[...], preferred_element_type=jnp.float32
        ).astype(jnp.bfloat16)

    # Row-tile aggregation:  y_i = d_i ⊙ ((A_i @ s') + s'_i) + b_l
    # which is exactly the row tile of  D^-1/2 (A+I) D^-1/2 (h W_l) + b_l.
    r0 = pl.multiple_of(row * tm, tm)
    if adj_resident:
        a_tile = adj_ref[pl.ds(r0, tm), :]      # slice the VMEM-resident adjacency
    else:
        a_tile = adj_ref[...]                   # auto-pipelined (tm, n_pad) stream tile
    agg = jnp.dot(a_tile.astype(jnp.bfloat16), s_ref[...],
                  preferred_element_type=jnp.float32)
    self_term = s_ref[pl.ds(r0, tm), :].astype(jnp.float32)   # the "+I" part
    d_row = d_ref[...]
    y = d_row * (agg + self_term) + b_ref[...]

    # Hidden layers: ReLU, rescale by d (so the residency stays h~ = d ⊙ h).
    @pl.when(layer < num_layers - 1)
    def _store_hidden():
        h_ref[pl.ds(r0, tm), :] = (d_row * jnp.maximum(y, 0.0)).astype(jnp.bfloat16)

    # Only the final layer stores to the HBM output (earlier stores would be dead work).
    @pl.when(layer == num_layers - 1)
    def _store_out():
        out_ref[...] = y


# ----------------------------------------------------------------------------
# Wrapper: host prep, tiling / residency decisions, the single pallas_call
# ----------------------------------------------------------------------------
def graph_encoder_forward(x, adj, params, *, assume_binary_adj=True, force_stream=False):
    """x: (N, in_dim) f32 node features; adj: (N, N) f32 adjacency (no self loops)."""
    n, in_dim = x.shape
    num_layers = len(params)
    out_dim = params[-1][0].shape[1]
    f32, bf16 = jnp.float32, jnp.bfloat16

    # Lane-dense feature padding (multiple of 128).  Zero padding is exact end-to-end.
    fdims = ([in_dim, out_dim] + [w.shape[0] for w, _ in params]
             + [w.shape[1] for w, _ in params])
    fp = _round_up(max(fdims), 128)

    # Row tiling of the node axis (128-aligned, so int8/bf16 sublane packing is clean).
    n_pad_min = _round_up(n, 128)
    if n_pad_min <= 256:
        tm = n_pad = n_pad_min
    else:
        tm = 256
        n_pad = _round_up(n, tm)
    t = n_pad // tm

    # ---- host-side prep (fused by XLA with the pads/casts) ---------------------------
    deg = jnp.sum(adj.astype(f32), axis=1, keepdims=True)
    d = jax.lax.rsqrt(deg + 1.0)                                        # (n, 1)
    d_pad = jnp.zeros((n_pad, 1), f32).at[:n, :].set(d)                 # padded rows -> 0

    # int8 storage for the 0/1 adjacency halves the dominant HBM stream (exact);
    # fall back to bf16 storage for weighted graphs.
    adj_dtype = jnp.int8 if assume_binary_adj else bf16
    adj_p = jnp.zeros((n_pad, n_pad), adj_dtype).at[:n, :n].set(adj.astype(adj_dtype))

    # Features pre-scaled by d on the host:  (d ⊙ h) @ W == d ⊙ (h @ W),
    # so no full-length d vector ever lives in VMEM.
    x_t = jnp.zeros((n_pad, fp), bf16).at[:n, :in_dim].set(
        (d * x.astype(f32)).astype(bf16))

    w_stack = jnp.stack([
        jnp.zeros((fp, fp), bf16).at[:w.shape[0], :w.shape[1]].set(w.astype(bf16))
        for w, _ in params])
    b_stack = jnp.stack([
        jnp.zeros((1, fp), f32).at[0, :b.shape[0]].set(b.astype(f32))
        for _, b in params])

    # ---- adjacency residency decision (generation aware) -----------------------------
    vmem_limit = _vmem_limit_bytes()
    abytes = jnp.dtype(adj_dtype).itemsize
    resident_cost = 2 * n_pad * n_pad * abytes              # conservative (x2 window)
    base_cost = (4 * n_pad * fp                             # h~ + s' bf16 scratch
                 + 2 * tm * fp * 4                          # output double-buffer
                 + 2 * tm * 128 * 4                         # d tile (lane-padded)
                 + 2 * (fp * fp * 2 + fp * 4))              # W + b double-buffers
    adj_resident = (not force_stream) and (resident_cost + base_cost
                                           <= int(0.8 * vmem_limit))

    if adj_resident:
        adj_spec = pl.BlockSpec((n_pad, n_pad), lambda l, i: (0, 0))
        adj_hbm_reads = n_pad * n_pad * abytes
    else:
        # 3-deep buffering keeps the DMA engine busy across each layer's row-0 prologue.
        adj_spec = pl.BlockSpec((tm, n_pad), lambda l, i: (i, 0),
                                pipeline_mode=pl.Buffered(3))
        adj_hbm_reads = num_layers * n_pad * n_pad * abytes

    flops = num_layers * (2 * n_pad * fp * fp + 2 * n_pad * n_pad * fp)
    bytes_accessed = (adj_hbm_reads
                      + n_pad * fp * 2                                      # x~ (once)
                      + num_layers * n_pad * fp * 4                         # out writebacks
                      + num_layers * (fp * fp * 2 + fp * 4 + n_pad * 4))    # W, b, d

    kernel = functools.partial(_fused_gcn_kernel, tm=tm, adj_resident=adj_resident)
    out_p = pl.pallas_call(
        kernel,
        out_shape=jax.ShapeDtypeStruct((n_pad, fp), f32),
        grid=(num_layers, t),
        in_specs=[
            adj_spec,                                              # A (int8/bf16)
            pl.BlockSpec(memory_space=pl.ANY),                     # x~ raw HBM, DMA'd once
            pl.BlockSpec((tm, 1), lambda l, i: (i, 0)),            # d row tile
            pl.BlockSpec((None, fp, fp), lambda l, i: (l, 0, 0)),  # W_l (bf16)
            pl.BlockSpec((None, 1, fp), lambda l, i: (l, 0, 0)),   # b_l (f32)
        ],
        out_specs=pl.BlockSpec((tm, fp), lambda l, i: (i, 0)),
        scratch_shapes=[
            pltpu.VMEM((n_pad, fp), bf16),    # h~ : resident scaled activations
            pltpu.VMEM((n_pad, fp), bf16),    # s' : per-layer support (feeds the MXU)
            pltpu.SemaphoreType.DMA,          # one-time x~ load
        ],
        compiler_params=pltpu.CompilerParams(
            # The layer axis carries the h~/s' dependency and the row-tile axis writes
            # shared scratch read by the next layer -> both stay sequential on one core.
            dimension_semantics=("arbitrary", "arbitrary"),
            vmem_limit_bytes=vmem_limit,
        ),
        cost_estimate=pl.CostEstimate(flops=flops, transcendentals=0,
                                      bytes_accessed=bytes_accessed),
    )(adj_p, x_t, d_pad, w_stack, b_stack)

    return out_p[:n, :out_dim]


# ----------------------------------------------------------------------------
# Parameter init + pure-JAX f32 reference
# ----------------------------------------------------------------------------
def init_graph_encoder_params(key, in_dim, out_dim, num_layers=2):
    params = []
    dims = [(in_dim, in_dim)] * (num_layers - 1) + [(in_dim, out_dim)]
    for d_in, d_out in dims:
        key, kw, kb = jax.random.split(key, 3)
        bound = 1.0 / jnp.sqrt(jnp.float32(d_in))
        w = jax.random.uniform(kw, (d_in, d_out), jnp.float32, -bound, bound)
        b = jax.random.uniform(kb, (d_out,), jnp.float32, -bound, bound)
        params.append((w, b))
    return params


def reference_forward(x, adj, params):
    n = adj.shape[0]
    a_hat = adj + jnp.eye(n, dtype=adj.dtype)
    deg = jnp.sum(a_hat, axis=1)
    dinv = 1.0 / jnp.sqrt(deg)
    adj_n = dinv[:, None] * a_hat * dinv[None, :]
    h = x
    for w, b in params[:-1]:
        h = jnp.maximum(adj_n @ (h @ w) + b, 0.0)
    w, b = params[-1]
    return adj_n @ (h @ w) + b


def _make_graph(key, n):
    a = (jax.random.uniform(key, (n, n)) > 0.5).astype(jnp.float32)
    return jnp.maximum(a, a.T) * (1.0 - jnp.eye(n, dtype=jnp.float32))


if __name__ == "__main__":
    key = jax.random.PRNGKey(0)
    # bf16 MXU operands with f32 accumulation -> loosened tolerance vs the f32 reference.
    TOL = dict(atol=5e-2, rtol=5e-2)

    # --- case 1: tiny graph, single row tile, 2 layers (resident adjacency) -----------
    k_x, k_adj, k_p, key = jax.random.split(key, 4)
    n1, in1, out1 = 8, 32, 16
    x1 = jax.random.normal(k_x, (n1, in1), jnp.float32)
    adj1 = _make_graph(k_adj, n1)
    params1 = init_graph_encoder_params(k_p, in1, out1, num_layers=2)

    out1_k = jax.block_until_ready(graph_encoder_forward(x1, adj1, params1))
    ref1 = reference_forward(x1, adj1, params1)
    assert out1_k.shape == (n1, out1)
    assert jnp.allclose(out1_k, ref1, **TOL), "case 1 mismatch vs reference"

    # --- case 2: multi row tile, 3 layers (resident adjacency path) -------------------
    k_x, k_adj, k_p, key = jax.random.split(key, 4)
    n2, in2, out2 = 300, 64, 32
    x2 = jax.random.normal(k_x, (n2, in2), jnp.float32)
    adj2 = _make_graph(k_adj, n2)
    params2 = init_graph_encoder_params(k_p, in2, out2, num_layers=3)

    out2_res = jax.block_until_ready(graph_encoder_forward(x2, adj2, params2))
    ref2 = reference_forward(x2, adj2, params2)
    assert out2_res.shape == (n2, out2)
    assert jnp.allclose(out2_res, ref2, **TOL), "case 2 mismatch vs reference"

    # --- case 3: same graph through the streaming (Buffered(3)) adjacency path --------
    out2_str = jax.block_until_ready(
        graph_encoder_forward(x2, adj2, params2, force_stream=True))
    assert jnp.allclose(out2_str, ref2, **TOL), "case 3 mismatch vs reference"

    print("KERNEL_OK")
</pallas_src>

<mosaic_0001>
module attributes {stable_mosaic.version = 11 : i64} {
  func.func @_fused_gcn_kernel(%arg0: i32, %arg1: i32, %arg2: memref<128x128xi8, #tpu.memory_space<vmem>>, %arg3: memref<128x128xbf16, #tpu.memory_space<any>>, %arg4: memref<128x1xf32, #tpu.memory_space<vmem>>, %arg5: memref<1x128x128xbf16, #tpu.memory_space<vmem>>, %arg6: memref<1x1x128xf32, #tpu.memory_space<vmem>>, %arg7: memref<128x128xf32, #tpu.memory_space<vmem>>, %arg8: memref<128x128xbf16, #tpu.memory_space<vmem>>, %arg9: memref<128x128xbf16, #tpu.memory_space<vmem>>, %arg10: memref<!tpu.dma_semaphore, #tpu.memory_space<semaphore_mem>>) attributes {dimension_semantics = [#tpu.dimension_semantics<arbitrary>, #tpu.dimension_semantics<arbitrary>], iteration_bounds = array<i64: 2, 1>, scalar_prefetch = 0 : i64, scratch_operands = 3 : i64, tpu.core_type = #tpu.core_type<tc>, window_params = [{pipeline_mode = #tpu.pipeline_mode<synchronous>, transform_indices = @transform_0, window_bounds = array<i64: 128, 128>}, {}, {transform_indices = @transform_2, window_bounds = array<i64: 128, 1>}, {transform_indices = @transform_3, window_bounds = array<i64: 1, 128, 128>}, {transform_indices = @transform_4, window_bounds = array<i64: 1, 1, 128>}, {transform_indices = @transform_5, window_bounds = array<i64: 128, 128>}]} {
    %c0_i32 = arith.constant 0 : i32
    %0 = arith.cmpi eq, %arg0, %c0_i32 : i32
    %c0_i32_0 = arith.constant 0 : i32
    %1 = arith.cmpi eq, %arg1, %c0_i32_0 : i32
    %2 = arith.andi %0, %1 : i1
    %3 = arith.extui %2 : i1 to i32
    %c0_i32_1 = arith.constant 0 : i32
    %4 = arith.cmpi ne, %3, %c0_i32_1 : i32
    scf.if %4 {
      tpu.enqueue_dma source(%arg3 : memref<128x128xbf16, #tpu.memory_space<any>>) target(%arg8 : memref<128x128xbf16, #tpu.memory_space<vmem>>) target_semaphore(%arg10 : memref<!tpu.dma_semaphore, #tpu.memory_space<semaphore_mem>>)
      tpu.wait_dma2 semaphore(%arg10 : memref<!tpu.dma_semaphore, #tpu.memory_space<semaphore_mem>>) src(%arg3 : memref<128x128xbf16, #tpu.memory_space<any>>) dst(%arg8 : memref<128x128xbf16, #tpu.memory_space<vmem>>)
    } else {
    }
    %c0_i32_2 = arith.constant 0 : i32
    %5 = arith.cmpi eq, %arg1, %c0_i32_2 : i32
    %6 = arith.extui %5 : i1 to i32
    %c0_i32_3 = arith.constant 0 : i32
    %7 = arith.cmpi ne, %6, %c0_i32_3 : i32
    scf.if %7 {
      %c0_15 = arith.constant 0 : index
      %c0_16 = arith.constant 0 : index
      %32 = vector.load %arg8[%c0_15, %c0_16] : memref<128x128xbf16, #tpu.memory_space<vmem>>, vector<128x128xbf16>
      %c0_17 = arith.constant 0 : index
      %c0_18 = arith.constant 0 : index
      %c0_19 = arith.constant 0 : index
      %33 = vector.load %arg5[%c0_17, %c0_18, %c0_19] : memref<1x128x128xbf16, #tpu.memory_space<vmem>>, vector<1x128x128xbf16>
      %34 = vector.shape_cast %33 : vector<1x128x128xbf16> to vector<128x128xbf16>
      %cst_20 = arith.constant dense<0.000000e+00> : vector<128x128xf32>
      %35 = tpu.matmul %32, %34, %cst_20 {dimension_numbers = #tpu.dot_dimension_numbers<[1], [0], [0], [1], [0, 0, 1, 1], [], []>} : vector<128x128xbf16>, vector<128x128xbf16>, vector<128x128xf32> -> vector<128x128xf32>
      %36 = arith.truncf %35 : vector<128x128xf32> to vector<128x128xbf16>
      %c0_21 = arith.constant 0 : index
      %c0_22 = arith.constant 0 : index
      %37 = vector.load %arg9[%c0_21, %c0_22] : memref<128x128xbf16, #tpu.memory_space<vmem>>, vector<128x128xbf16>
      tpu.vector_store %arg9[%c0_21, %c0_22], %36 {strides = array<i32>} : memref<128x128xbf16, #tpu.memory_space<vmem>>, vector<128x128xbf16>,
    } else {
    }
    %c128_i32 = arith.constant 128 : i32
    %8 = arith.muli %arg1, %c128_i32 : i32
    %9 = tpu.assume_multiple %8, 128 : i32
    %10 = arith.index_cast %9 : i32 to index
    %c0 = arith.constant 0 : index
    %11 = vector.load %arg2[%10, %c0] : memref<128x128xi8, #tpu.memory_space<vmem>>, vector<128x128xi8>
    %12 = arith.sitofp %11 : vector<128x128xi8> to vector<128x128xbf16>
    %c0_4 = arith.constant 0 : index
    %c0_5 = arith.constant 0 : index
    %13 = vector.load %arg9[%c0_4, %c0_5] : memref<128x128xbf16, #tpu.memory_space<vmem>>, vector<128x128xbf16>
    %cst = arith.constant dense<0.000000e+00> : vector<128x128xf32>
    %14 = tpu.matmul %12, %13, %cst {dimension_numbers = #tpu.dot_dimension_numbers<[1], [0], [0], [1], [0, 0, 1, 1], [], []>} : vector<128x128xbf16>, vector<128x128xbf16>, vector<128x128xf32> -> vector<128x128xf32>
    %15 = arith.index_cast %9 : i32 to index
    %c0_6 = arith.constant 0 : index
    %16 = vector.load %arg9[%15, %c0_6] : memref<128x128xbf16, #tpu.memory_space<vmem>>, vector<128x128xbf16>
    %17 = arith.extf %16 : vector<128x128xbf16> to vector<128x128xf32>
    %c0_7 = arith.constant 0 : index
    %c0_8 = arith.constant 0 : index
    %18 = vector.load %arg4[%c0_7, %c0_8] : memref<128x1xf32, #tpu.memory_space<vmem>>, vector<128x1xf32>
    %19 = arith.addf %14, %17 : vector<128x128xf32>
    %20 = vector.broadcast %18 : vector<128x1xf32> to vector<128x128xf32>
    %21 = arith.mulf %20, %19 : vector<128x128xf32>
    %c0_9 = arith.constant 0 : index
    %c0_10 = arith.constant 0 : index
    %c0_11 = arith.constant 0 : index
    %22 = vector.load %arg6[%c0_9, %c0_10, %c0_11] : memref<1x1x128xf32, #tpu.memory_space<vmem>>, vector<1x1x128xf32>
    %23 = vector.shape_cast %22 : vector<1x1x128xf32> to vector<1x128xf32>
    %24 = vector.broadcast %23 : vector<1x128xf32> to vector<128x128xf32>
    %25 = arith.addf %21, %24 : vector<128x128xf32>
    %c1_i32 = arith.constant 1 : i32
    %26 = arith.cmpi slt, %arg0, %c1_i32 : i32
    %27 = arith.extui %26 : i1 to i32
    %c0_i32_12 = arith.constant 0 : i32
    %28 = arith.cmpi ne, %27, %c0_i32_12 : i32
    scf.if %28 {
      %cst_15 = arith.constant 0.000000e+00 : f32
      %32 = vector.broadcast %cst_15 : f32 to vector<128x128xf32>
      %33 = arith.maximumf %25, %32 : vector<128x128xf32>
      %34 = vector.broadcast %18 : vector<128x1xf32> to vector<128x128xf32>
      %35 = arith.mulf %34, %33 : vector<128x128xf32>
      %36 = arith.truncf %35 : vector<128x128xf32> to vector<128x128xbf16>
      %37 = arith.index_cast %9 : i32 to index
      %c0_16 = arith.constant 0 : index
      %38 = vector.load %arg8[%37, %c0_16] : memref<128x128xbf16, #tpu.memory_space<vmem>>, vector<128x128xbf16>
      tpu.vector_store %arg8[%37, %c0_16], %36 {strides = array<i32>} : memref<128x128xbf16, #tpu.memory_space<vmem>>, vector<128x128xbf16>,
    } else {
    }
    %c1_i32_13 = arith.constant 1 : i32
    %29 = arith.cmpi eq, %arg0, %c1_i32_13 : i32
    %30 = arith.extui %29 : i1 to i32
    %c0_i32_14 = arith.constant 0 : i32
    %31 = arith.cmpi ne, %30, %c0_i32_14 : i32
    scf.if %31 {
      %c0_15 = arith.constant 0 : index
      %c0_16 = arith.constant 0 : index
      %32 = vector.load %arg7[%c0_15, %c0_16] : memref<128x128xf32, #tpu.memory_space<vmem>>, vector<128x128xf32>
      tpu.vector_store %arg7[%c0_15, %c0_16], %25 {strides = array<i32>} : memref<128x128xf32, #tpu.memory_space<vmem>>, vector<128x128xf32>,
    } else {
    }
    return
  }
  func.func @transform_0(%arg0: i32, %arg1: i32) -> (i32, i32) {
    %c0_i32 = arith.constant 0 : i32
    %c0_i32_0 = arith.constant 0 : i32
    %c0_i32_1 = arith.constant 0 : i32
    return %c0_i32, %c0_i32_0 : i32, i32
  }
  func.func @transform_2(%arg0: i32, %arg1: i32) -> (i32, i32) {
    %c0_i32 = arith.constant 0 : i32
    %c0_i32_0 = arith.constant 0 : i32
    return %arg1, %c0_i32 : i32, i32
  }
  func.func @transform_3(%arg0: i32, %arg1: i32) -> (i32, i32, i32) {
    %c0_i32 = arith.constant 0 : i32
    %c0_i32_0 = arith.constant 0 : i32
    %c0_i32_1 = arith.constant 0 : i32
    return %arg0, %c0_i32, %c0_i32_0 : i32, i32, i32
  }
  func.func @transform_4(%arg0: i32, %arg1: i32) -> (i32, i32, i32) {
    %c0_i32 = arith.constant 0 : i32
    %c0_i32_0 = arith.constant 0 : i32
    %c0_i32_1 = arith.constant 0 : i32
    return %arg0, %c0_i32, %c0_i32_0 : i32, i32, i32
  }
  func.func @transform_5(%arg0: i32, %arg1: i32) -> (i32, i32) {
    %c0_i32 = arith.constant 0 : i32
    %c0_i32_0 = arith.constant 0 : i32
    return %arg1, %c0_i32 : i32, i32
  }
}

</mosaic_0001>

<llo_original>
// kernel: tpu_custom_call.1
$region0: #{tpu_custom_call.1}
  #allocation0 [shape = 'u32[]', space=smem, size = 0x4, offset = 0x4, fixed_abs, tag = 'smem constant byte address 0x4 - core index']
  #allocation1 [shape = 'u32[72,128]{1,0:T(1,128)}', space=vmem, size = 0x9000, scoped, tag = 'internal scratch']
  #allocation2 [shape = 'bf16[128,128]{1,0:T(8,128)(2,1)}', space=vmem, size = 0x8000, scoped, tag = 'scratch operand']
  #allocation3 [shape = 'bf16[128,128]{1,0:T(8,128)(2,1)}', space=vmem, size = 0x8000, scoped, tag = 'scratch operand']
  #allocation4 [shape = 's32[1]{0}', space=sflag, size = 0x4, scoped, tag = 'scratch operand']
  #allocation9 [shape = 's32[]', space=sflag, size = 0x4, offset = 0, fixed_abs, tag = 'sflag constant byte address 0x0 - dummy sync flag']
  #allocation10 [shape = 's32[]', space=sflag, size = 0x4, offset = 0, fixed_abs, tag = 'sflag constant byte address 0x0 - dummy sync flag']
  #allocation11 [shape = 'u32[]', space=smem, size = 0x4, offset = 0x44, fixed_abs, tag = 'smem constant byte address 0x44 - assertion arg 0']
  #allocation12 [shape = 'u32[]', space=smem, size = 0x4, offset = 0x48, fixed_abs, tag = 'smem constant byte address 0x48 - assertion arg 1']
  %s0 = inlined_call_operand.hbm [shape: s8[128,128], index: 0, kind: input, shape index: {}]
  %s1 = inlined_call_operand.hbm [shape: bf16[128,128], index: 1, kind: input, shape index: {}]
  %s2 = inlined_call_operand.vmem [shape: f32[128,1], index: 2, kind: input, shape index: {}]
  %s3 = inlined_call_operand.vmem [shape: bf16[2,128,128], index: 3, kind: input, shape index: {}]
  %s4 = inlined_call_operand.vmem [shape: f32[2,1,128], index: 4, kind: input, shape index: {}]
  %s5 = inlined_call_operand.hbm [shape: f32[128,128], index: 5, kind: output, shape index: {}]
  %s6 = sld [smem:[#allocation0]]
  $region73: #{tpu_custom_call.1} parent=0
    _
  %s8 = ssub.s32 1, %s6
  %s9 = scalar_select 0, %s8, %s6
  $region1: #{tpu_custom_call.1} parent=0
    #allocation5 [shape = 'u8[16384]{0}', space=vmem, size = 0x4000, scoped, tag = 'input window, operand 0, single buffered']
    #allocation6 [shape = 's32[2]{0}', space=sflag, size = 0x8, scoped, tag = 'scoped memory for tpu_custom_call.1']
    #allocation7 [shape = 's32[2]{0}', space=sflag, size = 0x8, scoped, tag = 'scoped memory for tpu_custom_call.1']
    #allocation8 [shape = 'u8[65536]{0}', space=vmem, size = 0x10000, scoped, tag = 'output window, operand 0, single buffered']
    %10 = vsyncpa [#allocation6], 0
    %11 = vsyncpa [#allocation7], 0
    loop: start=0, step=1, limit=4
    $region2: #{tpu_custom_call.1} parent=1 // loop_pre_header
      _
    $region3: #{tpu_custom_call.1} parent=1 // loop_header
      %s13 = sphi 0, %s17
      %p14 = scmp.ge.s32.totalorder %s13, 4
      %s20 = sphi 0, %s32
      %s21 = sphi 0, %s28
      %s22 = sphi 0, %s20
      %s23 = sphi 0, %s21
      %s24 = sphi 0, %s22
      %s25 = sphi 0, %s23
      %s33 = sphi 0, %s33
      %s35 = sphi 0, %s33
      %s36 = sphi 0, %s35
      %s50 = sphi 0, %s36
      %s56 = sphi 0, %s58
      %s59 = sphi 0, %s56
      %s60 = sphi 0, %s59
      %s76 = sphi 0, %s60
      %s82 = sphi 0, %s84
      %s85 = sphi 0, %s82
      %s86 = sphi 0, %s85
      %s102 = sphi 0, %s86
      %s108 = sphi 0, %s110
      %s111 = sphi 0, %s108
      %s112 = sphi 0, %s111
      %s128 = sphi 0, %s112
      %s134 = sphi 0, %s136
      %s137 = sphi 0, %s134
      %s138 = sphi 0, %s137
      %s154 = sphi 0, %s138
    $region4: #{tpu_custom_call.1} parent=1 // loop_header_branch
      %16 = sbr.rel (%p14) target = $region8
    $region5: #{tpu_custom_call.1} parent=1 // loop_body
      %s18 = ssub.s32 %s13, 1
      %s19 = ssub.s32 %s13, 2
      %s26 = sadd.s32 1, %s21
      %p27 = scmp.ge.s32.totalorder %s26, 1
      %s28 = scalar_select %p27, 0, %s26
      %s29 = sadd.s32 1, %s20
      %s30 = scalar_select %p27, %s29, %s20
      %p31 = scmp.ge.s32.totalorder %s30, 2
      %s32 = scalar_select %p31, 0, %s30
      %s34 = sadd.s32 %s33, 1
      %p37 = scmp.eq.s32.totalorder %s13, 1
      %p38 = scmp.ne.s32.totalorder %s33, %s35
      %p39 = scmp.eq.s32.totalorder %s13, 0
      %p40 = por %p38, %p39
      %p41 = scmp.ne.s32.totalorder %s33, %s35
      %p42 = scmp.eq.s32.totalorder %s18, 1
      %p43 = por %p41, %p42
      %p44 = scmp.ne.s32.totalorder %s35, %s36
      %p45 = scmp.eq.s32.totalorder %s18, 0
      %p46 = por %p44, %p45
      %p47 = scmp.ne.s32.totalorder %s35, %s36
      %p48 = scmp.eq.s32.totalorder %s19, 1
      %p49 = por %p47, %p48
      %p51 = scmp.ne.s32.totalorder %s36, %s50
      %p52 = scmp.eq.s32.totalorder %s19, 0
      %p53 = por %p51, %p52
      %s54 = ssub.s32 %s21, %s28
      %p55 = scmp.eq.s32.totalorder %s54, 0
      %s57 = sadd.s32 %s56, 1
      %s58 = scalar_select %p55, %s56, %s57
      %p61 = pneg %p55
      %p62 = scmp.eq.s32.totalorder %s13, 1
      %p63 = por %p61, %p62
      %p64 = scmp.ne.s32.totalorder %s56, %s59
      %p65 = scmp.eq.s32.totalorder %s13, 0
      %p66 = por %p64, %p65
      %p67 = scmp.ne.s32.totalorder %s56, %s59
      %p68 = scmp.eq.s32.totalorder %s18, 1
      %p69 = por %p67, %p68
      %p70 = scmp.ne.s32.totalorder %s59, %s60
      %p71 = scmp.eq.s32.totalorder %s18, 0
      %p72 = por %p70, %p71
      %p73 = scmp.ne.s32.totalorder %s59, %s60
      %p74 = scmp.eq.s32.totalorder %s19, 1
      %p75 = por %p73, %p74
      %p77 = scmp.ne.s32.totalorder %s60, %s76
      %p78 = scmp.eq.s32.totalorder %s19, 0
      %p79 = por %p77, %p78
      %s80 = ssub.s32 %s20, %s32
      %p81 = scmp.eq.s32.totalorder %s80, 0
      %s83 = sadd.s32 %s82, 1
      %s84 = scalar_select %p81, %s82, %s83
      %p87 = pneg %p81
      %p88 = scmp.eq.s32.totalorder %s13, 1
      %p89 = por %p87, %p88
      %p90 = scmp.ne.s32.totalorder %s82, %s85
      %p91 = scmp.eq.s32.totalorder %s13, 0
      %p92 = por %p90, %p91
      %p93 = scmp.ne.s32.totalorder %s82, %s85
      %p94 = scmp.eq.s32.totalorder %s18, 1
      %p95 = por %p93, %p94
      %p96 = scmp.ne.s32.totalorder %s85, %s86
      %p97 = scmp.eq.s32.totalorder %s18, 0
      %p98 = por %p96, %p97
      %p99 = scmp.ne.s32.totalorder %s85, %s86
      %p100 = scmp.eq.s32.totalorder %s19, 1
      %p101 = por %p99, %p100
      %p103 = scmp.ne.s32.totalorder %s86, %s102
      %p104 = scmp.eq.s32.totalorder %s19, 0
      %p105 = por %p103, %p104
      %s106 = ssub.s32 %s20, %s32
      %p107 = scmp.eq.s32.totalorder %s106, 0
      %s109 = sadd.s32 %s108, 1
      %s110 = scalar_select %p107, %s108, %s109
      %p113 = pneg %p107
      %p114 = scmp.eq.s32.totalorder %s13, 1
      %p115 = por %p113, %p114
      %p116 = scmp.ne.s32.totalorder %s108, %s111
      %p117 = scmp.eq.s32.totalorder %s13, 0
      %p118 = por %p116, %p117
      %p119 = scmp.ne.s32.totalorder %s108, %s111
      %p120 = scmp.eq.s32.totalorder %s18, 1
      %p121 = por %p119, %p120
      %p122 = scmp.ne.s32.totalorder %s111, %s112
      %p123 = scmp.eq.s32.totalorder %s18, 0
      %p124 = por %p122, %p123
      %p125 = scmp.ne.s32.totalorder %s111, %s112
      %p126 = scmp.eq.s32.totalorder %s19, 1
      %p127 = por %p125, %p126
      %p129 = scmp.ne.s32.totalorder %s112, %s128
      %p130 = scmp.eq.s32.totalorder %s19, 0
      %p131 = por %p129, %p130
      %s132 = ssub.s32 %s21, %s28
      %p133 = scmp.eq.s32.totalorder %s132, 0
      %s135 = sadd.s32 %s134, 1
      %s136 = scalar_select %p133, %s134, %s135
      %p139 = pneg %p133
      %p140 = scmp.eq.s32.totalorder %s13, 1
      %p141 = por %p139, %p140
      %p142 = scmp.ne.s32.totalorder %s134, %s137
      %p143 = scmp.eq.s32.totalorder %s13, 0
      %p144 = por %p142, %p143
      %p145 = scmp.ne.s32.totalorder %s134, %s137
      %p146 = scmp.eq.s32.totalorder %s18, 1
      %p147 = por %p145, %p146
      %p148 = scmp.ne.s32.totalorder %s137, %s138
      %p149 = scmp.eq.s32.totalorder %s18, 0
      %p150 = por %p148, %p149
      %p151 = scmp.ne.s32.totalorder %s137, %s138
      %p152 = scmp.eq.s32.totalorder %s19, 1
      %p153 = por %p151, %p152
      %p155 = scmp.ne.s32.totalorder %s138, %s154
      %p156 = scmp.eq.s32.totalorder %s19, 0
      %p157 = por %p155, %p156
      %p158 = scmp.le.s32.totalorder 1, %s13
      %p159 = scmp.lt.s32.totalorder %s13, 3
      %p160 = pnand %p158, %p159
      %p161 = pneg %p160
      // Predicated region
      $region9: #{tpu_custom_call.1} parent=5 // pred_check
        _
      $region10: #{tpu_custom_call.1} parent=5 // pred_check_branch
        %163 = sbr.rel (%p160) target = $region12
      $region11: #{tpu_custom_call.1} parent=5 // pred_region
        %s164 = ssub.s32 %s13, 1
        // Predicated region
        $region13: #{tpu_custom_call.1} parent=11 // pred_check
          %p165 = pneg %p46
        $region14: #{tpu_custom_call.1} parent=11 // pred_check_branch
          %167 = sbr.rel (%p165) target = $region16
        $region15: #{tpu_custom_call.1} parent=11 // pred_region
          %169 = vsyncadd [#allocation6], 0
          %s170 = sshll.u32 %s0, 4
          %s171 = int_to_ptr.hbm [resolvable:$true] %s170
          %s172 = sshll.u32 [#allocation5], 4
          %s173 = int_to_ptr.vmem [resolvable:$true] %s172
          %178 = dma.hbm_to_vmem [thread:$0]  %s171, 512, %s173, [#allocation6], 128, 128, 8
        $region16: #{tpu_custom_call.1} parent=11 // pred_fallthru
          _
        // Predicated region
        $region17: #{tpu_custom_call.1} parent=11 // pred_check
          %p179 = pneg %p72
        $region18: #{tpu_custom_call.1} parent=11 // pred_check_branch
          %181 = sbr.rel (%p179) target = $region20
        $region19: #{tpu_custom_call.1} parent=11 // pred_region
          %s182 = smul.u32 16, %s23
          %p183 = scmp.lt.s32.totalorder %s182, 15
          %s184 = scalar_select %p183, %s182, 15
          %s185 = smul.addr %s184, 8
          %s186 = scalar_lea.vmem %s2, %s185
          %s187 = smul.u32 16, %s23
        $region20: #{tpu_custom_call.1} parent=11 // pred_fallthru
          _
      $region12: #{tpu_custom_call.1} parent=5 // pred_fallthru
        _
      %p188 = scmp.lt.s32.totalorder %s13, 2
      // Predicated region
      $region21: #{tpu_custom_call.1} parent=5 // pred_check
        %p189 = pneg %p188
      $region22: #{tpu_custom_call.1} parent=5 // pred_check_branch
        %191 = sbr.rel (%p189) target = $region24
      $region23: #{tpu_custom_call.1} parent=5 // pred_region
        // Predicated region
        $region25: #{tpu_custom_call.1} parent=23 // pred_check
          %p192 = pneg %p92
        $region26: #{tpu_custom_call.1} parent=23 // pred_check_branch
          %194 = sbr.rel (%p192) target = $region28
        $region27: #{tpu_custom_call.1} parent=23 // pred_region
          %p195 = scmp.lt.s32.totalorder %s20, 1
          %s196 = scalar_select %p195, %s20, 1
          %s197 = smul.addr %s196, 16
          %s198 = smul.addr %s197, 4
          %s199 = scalar_lea.vmem %s3, %s198
        $region28: #{tpu_custom_call.1} parent=23 // pred_fallthru
          _
        // Predicated region
        $region29: #{tpu_custom_call.1} parent=23 // pred_check
          %p200 = pneg %p118
        $region30: #{tpu_custom_call.1} parent=23 // pred_check_branch
          %202 = sbr.rel (%p200) target = $region32
        $region31: #{tpu_custom_call.1} parent=23 // pred_region
          %p203 = scmp.lt.s32.totalorder %s20, 1
          %s204 = scalar_select %p203, %s20, 1
          %s205 = scalar_lea.vmem %s4, %s204
        $region32: #{tpu_custom_call.1} parent=23 // pred_fallthru
          _
      $region24: #{tpu_custom_call.1} parent=5 // pred_fallthru
        _
      %p206 = scmp.le.s32.totalorder 1, %s13
      %p207 = scmp.lt.s32.totalorder %s13, 3
      %p208 = pnand %p206, %p207
      %p209 = pneg %p208
      // Predicated region
      $region33: #{tpu_custom_call.1} parent=5 // pred_check
        _
      $region34: #{tpu_custom_call.1} parent=5 // pred_check_branch
        %211 = sbr.rel (%p208) target = $region36
      $region35: #{tpu_custom_call.1} parent=5 // pred_region
        %s212 = ssub.s32 %s13, 1
        // Predicated region
        $region37: #{tpu_custom_call.1} parent=35 // pred_check
          %p213 = pneg %p46
        $region38: #{tpu_custom_call.1} parent=35 // pred_check_branch
          %215 = sbr.rel (%p213) target = $region40
        $region39: #{tpu_custom_call.1} parent=35 // pred_region
          %217 = dma.done [#allocation6], 512
        $region40: #{tpu_custom_call.1} parent=35 // pred_fallthru
          _
        %p218 = pneg %p46
        %p219 = pneg %p43
        %s220 = smul.u32 16, %s23
        %p221 = scmp.lt.s32.totalorder %s220, 15
        %s222 = scalar_select %p221, %s220, 15
        %s223 = smul.addr %s222, 8
        %s224 = scalar_lea.vmem %s2, %s223
        %p225 = pneg %p72
        %p226 = pneg %p69
        %p227 = scmp.lt.s32.totalorder %s22, 1
        %s228 = scalar_select %p227, %s22, 1
        %s229 = smul.addr %s228, 16
        %s230 = smul.addr %s229, 4
        %s231 = scalar_lea.vmem %s3, %s230
        %p232 = pneg %p98
        %p233 = pneg %p95
        %p234 = scmp.lt.s32.totalorder %s22, 1
        %s235 = scalar_select %p234, %s22, 1
        %s236 = scalar_lea.vmem %s4, %s235
        %p237 = pneg %p124
        %p238 = pneg %p121
        %p239 = pneg %p150
        %p240 = pneg %p147
        %s241 = smul.u32 16, %s23
        %p242 = scmp.lt.s32.totalorder %s241, 15
        %s243 = scalar_select %p242, %s241, 15
        %s244 = smul.addr %s243, 8
        %s245 = scalar_lea.vmem %s2, %s244
        %s246 = smul.u32 16, %s23
        %p247 = scmp.lt.s32.totalorder %s22, 1
        %s248 = scalar_select %p247, %s22, 1
        %s249 = smul.addr %s248, 16
        %s250 = smul.addr %s249, 4
        %s251 = scalar_lea.vmem %s3, %s250
        %p252 = scmp.lt.s32.totalorder %s22, 1
        %s253 = scalar_select %p252, %s22, 1
        %s254 = scalar_lea.vmem %s4, %s253
        %s255 = smul.u32 16, %s23
        %p256 = scmp.eq.s32.totalorder %s22, 0
        %p257 = scmp.eq.s32.totalorder %s23, 0
        %p258 = pnand %p256, %p257
        %p259 = pneg %p258
        // Predicated region
        $region41: #{tpu_custom_call.1} parent=35 // pred_check
          _
        $region42: #{tpu_custom_call.1} parent=35 // pred_check_branch
          %261 = sbr.rel (%p258) target = $region44
        $region43: #{tpu_custom_call.1} parent=35 // pred_region
          // Predicated region
          $region45: #{tpu_custom_call.1} parent=43 // pred_check
            _
          $region46: #{tpu_custom_call.1} parent=43 // pred_check_branch
            %263 = sbr.rel target = $region48
          $region47: #{tpu_custom_call.1} parent=43 // pred_region
            %264 = sst [smem:[#allocation11]] [#allocation10]
            %265 = sst [smem:[#allocation12]] [#allocation9]
          $region48: #{tpu_custom_call.1} parent=43 // pred_fallthru
            _
          %267 = shalt.err (0)
          %s269 = sshll.u32 %s1, 4
          %s270 = int_to_ptr.hbm [resolvable:$true] %s269
          %s271 = sshll.u32 [#allocation2], 4
          %s272 = int_to_ptr.vmem [resolvable:$true] %s271
          %274 = dma.hbm_to_vmem [thread:$0]  %s270, 1024, %s272, [#allocation4]
          %s275 = smul.u32 4, 16
          %s276 = smul.u32 %s275, 1
          %s277 = sshll.u32 %s276, 4
          %278 = dma.done [#allocation4], %s277
        $region44: #{tpu_custom_call.1} parent=35 // pred_fallthru
          _
        // Predicated region
        $region49: #{tpu_custom_call.1} parent=35 // pred_check
          %p279 = pneg %p257
        $region50: #{tpu_custom_call.1} parent=35 // pred_check_branch
          %281 = sbr.rel (%p279) target = $region52
        $region51: #{tpu_custom_call.1} parent=35 // pred_region
          %v282 = vld [vmem:[#allocation2] sm:$0xf]
          %v283 = vld [vmem:[#allocation2 + $0x4] sm:$0xf]
          %v284 = vld [vmem:[#allocation2 + $0x8] sm:$0xf]
          %v285 = vld [vmem:[#allocation2 + $0xc] sm:$0xf]
          %v286 = vld [vmem:[#allocation2 + $0x10] sm:$0xf]
          %v287 = vld [vmem:[#allocation2 + $0x14] sm:$0xf]
          %v288 = vld [vmem:[#allocation2 + $0x18] sm:$0xf]
          %v289 = vld [vmem:[#allocation2 + $0x1c] sm:$0xf]
          %v290 = vld [vmem:[#allocation2 + $0x20] sm:$0xf]
          %v291 = vld [vmem:[#allocation2 + $0x24] sm:$0xf]
          %v292 = vld [vmem:[#allocation2 + $0x28] sm:$0xf]
          %v293 = vld [vmem:[#allocation2 + $0x2c] sm:$0xf]
          %v294 = vld [vmem:[#allocation2 + $0x30] sm:$0xf]
          %v295 = vld [vmem:[#allocation2 + $0x34] sm:$0xf]
          %v296 = vld [vmem:[#allocation2 + $0x38] sm:$0xf]
          %v297 = vld [vmem:[#allocation2 + $0x3c] sm:$0xf]
          %v298 = vld [vmem:[%s251] sm:$0xf]
          %v299 = vld [vmem:[%s251 + $0x4] sm:$0xf]
          %v300 = vld [vmem:[%s251 + $0x8] sm:$0xf]
          %v301 = vld [vmem:[%s251 + $0xc] sm:$0xf]
          %v302 = vld [vmem:[%s251 + $0x10] sm:$0xf]
          %v303 = vld [vmem:[%s251 + $0x14] sm:$0xf]
          %v304 = vld [vmem:[%s251 + $0x18] sm:$0xf]
          %v305 = vld [vmem:[%s251 + $0x1c] sm:$0xf]
          %v306 = vld [vmem:[%s251 + $0x20] sm:$0xf]
          %v307 = vld [vmem:[%s251 + $0x24] sm:$0xf]
          %v308 = vld [vmem:[%s251 + $0x28] sm:$0xf]
          %v309 = vld [vmem:[%s251 + $0x2c] sm:$0xf]
          %v310 = vld [vmem:[%s251 + $0x30] sm:$0xf]
          %v311 = vld [vmem:[%s251 + $0x34] sm:$0xf]
          %v312 = vld [vmem:[%s251 + $0x38] sm:$0xf]
          %v313 = vld [vmem:[%s251 + $0x3c] sm:$0xf]
          %v330 = vunpack.c.l.b16 %v282
          %v331 = vunpack.c.l.b16 %v283
          %v332 = vunpack.c.l.b16 %v284
          %v333 = vunpack.c.l.b16 %v285
          %v334 = vunpack.c.l.b16 %v286
          %v335 = vunpack.c.l.b16 %v287
          %v336 = vunpack.c.l.b16 %v288
          %v337 = vunpack.c.l.b16 %v289
          %v338 = vunpack.c.l.b16 %v290
          %v339 = vunpack.c.l.b16 %v291
          %v340 = vunpack.c.l.b16 %v292
          %v341 = vunpack.c.l.b16 %v293
          %v342 = vunpack.c.l.b16 %v294
          %v343 = vunpack.c.l.b16 %v295
          %v344 = vunpack.c.l.b16 %v296
          %v345 = vunpack.c.l.b16 %v297
          %v346 = vpack.c.b16 %v331, %v330
          %v347 = vpack.c.b16 %v333, %v332
          %v348 = vpack.c.b16 %v335, %v334
          %v349 = vpack.c.b16 %v337, %v336
          %v350 = vpack.c.b16 %v339, %v338
          %v351 = vpack.c.b16 %v341, %v340
          %v352 = vpack.c.b16 %v343, %v342
          %v353 = vpack.c.b16 %v345, %v344
          %v378 = vunpack.c.l.b16 %v298
          %v379 = vunpack.c.l.b16 %v299
          %v380 = vunpack.c.l.b16 %v300
          %v381 = vunpack.c.l.b16 %v301
          %v382 = vunpack.c.l.b16 %v302
          %v383 = vunpack.c.l.b16 %v303
          %v384 = vunpack.c.l.b16 %v304
          %v385 = vunpack.c.l.b16 %v305
          %v386 = vunpack.c.l.b16 %v306
          %v387 = vunpack.c.l.b16 %v307
          %v388 = vunpack.c.l.b16 %v308
          %v389 = vunpack.c.l.b16 %v309
          %v390 = vunpack.c.l.b16 %v310
          %v391 = vunpack.c.l.b16 %v311
          %v392 = vunpack.c.l.b16 %v312
          %v393 = vunpack.c.l.b16 %v313
          %v394 = vpack.c.b16 %v379, %v378
          %v395 = vpack.c.b16 %v381, %v380
          %v396 = vpack.c.b16 %v383, %v382
          %v397 = vpack.c.b16 %v385, %v384
          %v398 = vpack.c.b16 %v387, %v386
          %v399 = vpack.c.b16 %v389, %v388
          %v400 = vpack.c.b16 %v391, %v390
          %v401 = vpack.c.b16 %v393, %v392
          %410 = vmatpush.bf16.msra.mxu0 %v401
          %411 = vmatpush.bf16.msra.mxu0 %v400
          %412 = vmatpush.bf16.msra.mxu0 %v399
          %413 = vmatpush.bf16.msra.mxu0 %v398
          %414 = vmatpush.bf16.msra.mxu0 %v397
          %415 = vmatpush.bf16.msra.mxu0 %v396
          %416 = vmatpush.bf16.msra.mxu0 %v395
          %417 = vmatpush.bf16.msra.mxu0 %v394
          %418 = vmatmul.bf16.gmra.mxu0 %v346
          %v419 = vpop.f32.mrf.mxu0
          %v420 = vadd.f32 0.0, %v419
          %v421 = vpop.f32.mrf.mxu0
          %v422 = vadd.f32 0.0, %v421
          %423 = vmatmul.bf16.gmra.mxu0 %v347
          %v424 = vpop.f32.mrf.mxu0
          %v425 = vadd.f32 0.0, %v424
          %v426 = vpop.f32.mrf.mxu0
          %v427 = vadd.f32 0.0, %v426
          %428 = vmatmul.bf16.gmra.mxu0 %v348
          %v429 = vpop.f32.mrf.mxu0
          %v430 = vadd.f32 0.0, %v429
          %v431 = vpop.f32.mrf.mxu0
          %v432 = vadd.f32 0.0, %v431
          %433 = vmatmul.bf16.gmra.mxu0 %v349
          %v434 = vpop.f32.mrf.mxu0
          %v435 = vadd.f32 0.0, %v434
          %v436 = vpop.f32.mrf.mxu0
          %v437 = vadd.f32 0.0, %v436
          %438 = vmatmul.bf16.gmra.mxu0 %v350
          %v439 = vpop.f32.mrf.mxu0
          %v440 = vadd.f32 0.0, %v439
          %v441 = vpop.f32.mrf.mxu0
          %v442 = vadd.f32 0.0, %v441
          %443 = vmatmul.bf16.gmra.mxu0 %v351
          %v444 = vpop.f32.mrf.mxu0
          %v445 = vadd.f32 0.0, %v444
          %v446 = vpop.f32.mrf.mxu0
          %v447 = vadd.f32 0.0, %v446
          %448 = vmatmul.bf16.gmra.mxu0 %v352
          %v449 = vpop.f32.mrf.mxu0
          %v450 = vadd.f32 0.0, %v449
          %v451 = vpop.f32.mrf.mxu0
          %v452 = vadd.f32 0.0, %v451
          %453 = vmatmul.bf16.gmra.mxu0 %v353
          %v454 = vpop.f32.mrf.mxu0
          %v455 = vadd.f32 0.0, %v454
          %v456 = vpop.f32.mrf.mxu0
          %v457 = vadd.f32 0.0, %v456
          %458 = vdwg.mxu0
          %v459 = vpack.c.bf16 %v420, %v420
          %v460 = vpack.c.bf16 %v422, %v422
          %v461 = vpack.c.bf16 %v425, %v425
          %v462 = vpack.c.bf16 %v427, %v427
          %v463 = vpack.c.bf16 %v430, %v430
          %v464 = vpack.c.bf16 %v432, %v432
          %v465 = vpack.c.bf16 %v435, %v435
          %v466 = vpack.c.bf16 %v437, %v437
          %v467 = vpack.c.bf16 %v440, %v440
          %v468 = vpack.c.bf16 %v442, %v442
          %v469 = vpack.c.bf16 %v445, %v445
          %v470 = vpack.c.bf16 %v447, %v447
          %v471 = vpack.c.bf16 %v450, %v450
          %v472 = vpack.c.bf16 %v452, %v452
          %v473 = vpack.c.bf16 %v455, %v455
          %v474 = vpack.c.bf16 %v457, %v457
          %475 = vst [vmem:[#allocation3] sm:$0xf] %v459
          %476 = vst [vmem:[#allocation3 + $0x4] sm:$0xf] %v460
          %477 = vst [vmem:[#allocation3 + $0x8] sm:$0xf] %v461
          %478 = vst [vmem:[#allocation3 + $0xc] sm:$0xf] %v462
          %479 = vst [vmem:[#allocation3 + $0x10] sm:$0xf] %v463
          %480 = vst [vmem:[#allocation3 + $0x14] sm:$0xf] %v464
          %481 = vst [vmem:[#allocation3 + $0x18] sm:$0xf] %v465
          %482 = vst [vmem:[#allocation3 + $0x1c] sm:$0xf] %v466
          %483 = vst [vmem:[#allocation3 + $0x20] sm:$0xf] %v467
          %484 = vst [vmem:[#allocation3 + $0x24] sm:$0xf] %v468
          %485 = vst [vmem:[#allocation3 + $0x28] sm:$0xf] %v469
          %486 = vst [vmem:[#allocation3 + $0x2c] sm:$0xf] %v470
          %487 = vst [vmem:[#allocation3 + $0x30] sm:$0xf] %v471
          %488 = vst [vmem:[#allocation3 + $0x34] sm:$0xf] %v472
          %489 = vst [vmem:[#allocation3 + $0x38] sm:$0xf] %v473
          %490 = vst [vmem:[#allocation3 + $0x3c] sm:$0xf] %v474
        $region52: #{tpu_custom_call.1} parent=35 // pred_fallthru
          _
        %s491 = smul.u32 %s23, 128
        %s492 = sshra.s32 %s491, 5
        %s493 = sand.u32 %s491, 31
        %s494 = smul.addr %s492, 8
        %s495 = scalar_lea.vmem [#allocation5], %s494
        %v496 = vld [vmem:[%s495] sm:$0xff]
        %v497 = vld [vmem:[%s495 + $0x8] sm:$0xff]
        %v498 = vld [vmem:[%s495 + $0x10] sm:$0xff]
        %v499 = vld [vmem:[%s495 + $0x18] sm:$0xff]
        %v500 = vunpack.c.0.s8 %v496
        %v501 = vunpack.c.1.s8 %v496
        %v502 = vunpack.c.2.s8 %v496
        %v503 = vunpack.c.3.s8 %v496
        %v504 = vunpack.c.0.s8 %v497
        %v505 = vunpack.c.1.s8 %v497
        %v506 = vunpack.c.2.s8 %v497
        %v507 = vunpack.c.3.s8 %v497
        %v508 = vunpack.c.0.s8 %v498
        %v509 = vunpack.c.1.s8 %v498
        %v510 = vunpack.c.2.s8 %v498
        %v511 = vunpack.c.3.s8 %v498
        %v512 = vunpack.c.0.s8 %v499
        %v513 = vunpack.c.1.s8 %v499
        %v514 = vunpack.c.2.s8 %v499
        %v515 = vunpack.c.3.s8 %v499
        %v516 = vcvt.s32.f32 %v500
        %v517 = vcvt.s32.f32 %v501
        %v518 = vcvt.s32.f32 %v502
        %v519 = vcvt.s32.f32 %v503
        %v520 = vcvt.s32.f32 %v504
        %v521 = vcvt.s32.f32 %v505
        %v522 = vcvt.s32.f32 %v506
        %v523 = vcvt.s32.f32 %v507
        %v524 = vcvt.s32.f32 %v508
        %v525 = vcvt.s32.f32 %v509
        %v526 = vcvt.s32.f32 %v510
        %v527 = vcvt.s32.f32 %v511
        %v528 = vcvt.s32.f32 %v512
        %v529 = vcvt.s32.f32 %v513
        %v530 = vcvt.s32.f32 %v514
        %v531 = vcvt.s32.f32 %v515
        %v532 = vpack.c.bf16 %v517, %v516
        %v533 = vpack.c.bf16 %v519, %v518
        %v534 = vpack.c.bf16 %v521, %v520
        %v535 = vpack.c.bf16 %v523, %v522
        %v536 = vpack.c.bf16 %v525, %v524
        %v537 = vpack.c.bf16 %v527, %v526
        %v538 = vpack.c.bf16 %v529, %v528
        %v539 = vpack.c.bf16 %v531, %v530
        %v540 = vld [vmem:[#allocation3] sm:$0xf]
        %v541 = vld [vmem:[#allocation3 + $0x4] sm:$0xf]
        %v542 = vld [vmem:[#allocation3 + $0x8] sm:$0xf]
        %v543 = vld [vmem:[#allocation3 + $0xc] sm:$0xf]
        %v544 = vld [vmem:[#allocation3 + $0x10] sm:$0xf]
        %v545 = vld [vmem:[#allocation3 + $0x14] sm:$0xf]
        %v546 = vld [vmem:[#allocation3 + $0x18] sm:$0xf]
        %v547 = vld [vmem:[#allocation3 + $0x1c] sm:$0xf]
        %v548 = vld [vmem:[#allocation3 + $0x20] sm:$0xf]
        %v549 = vld [vmem:[#allocation3 + $0x24] sm:$0xf]
        %v550 = vld [vmem:[#allocation3 + $0x28] sm:$0xf]
        %v551 = vld [vmem:[#allocation3 + $0x2c] sm:$0xf]
        %v552 = vld [vmem:[#allocation3 + $0x30] sm:$0xf]
        %v553 = vld [vmem:[#allocation3 + $0x34] sm:$0xf]
        %v554 = vld [vmem:[#allocation3 + $0x38] sm:$0xf]
        %v555 = vld [vmem:[#allocation3 + $0x3c] sm:$0xf]
        %s556 = sshra.s32 %s491, 3
        %s557 = sand.u32 %s491, 7
        %s558 = smul.addr %s556, 4
        %s559 = scalar_lea.vmem [#allocation3], %s558
        %v560 = vld [vmem:[%s559] sm:$0xf]
        %v561 = vld [vmem:[%s559 + $0x4] sm:$0xf]
        %v562 = vld [vmem:[%s559 + $0x8] sm:$0xf]
        %v563 = vld [vmem:[%s559 + $0xc] sm:$0xf]
        %v564 = vld [vmem:[%s559 + $0x10] sm:$0xf]
        %v565 = vld [vmem:[%s559 + $0x14] sm:$0xf]
        %v566 = vld [vmem:[%s559 + $0x18] sm:$0xf]
        %v567 = vld [vmem:[%s559 + $0x1c] sm:$0xf]
        %v568 = vld [vmem:[%s559 + $0x20] sm:$0xf]
        %v569 = vld [vmem:[%s559 + $0x24] sm:$0xf]
        %v570 = vld [vmem:[%s559 + $0x28] sm:$0xf]
        %v571 = vld [vmem:[%s559 + $0x2c] sm:$0xf]
        %v572 = vld [vmem:[%s559 + $0x30] sm:$0xf]
        %v573 = vld [vmem:[%s559 + $0x34] sm:$0xf]
        %v574 = vld [vmem:[%s559 + $0x38] sm:$0xf]
        %v575 = vld [vmem:[%s559 + $0x3c] sm:$0xf]
        %v576 = vunpack.c.l.bf16 %v560
        %v577 = vunpack.c.l.bf16 %v561
        %v578 = vunpack.c.l.bf16 %v562
        %v579 = vunpack.c.l.bf16 %v563
        %v580 = vunpack.c.l.bf16 %v564
        %v581 = vunpack.c.l.bf16 %v565
        %v582 = vunpack.c.l.bf16 %v566
        %v583 = vunpack.c.l.bf16 %v567
        %v584 = vunpack.c.l.bf16 %v568
        %v585 = vunpack.c.l.bf16 %v569
        %v586 = vunpack.c.l.bf16 %v570
        %v587 = vunpack.c.l.bf16 %v571
        %v588 = vunpack.c.l.bf16 %v572
        %v589 = vunpack.c.l.bf16 %v573
        %v590 = vunpack.c.l.bf16 %v574
        %v591 = vunpack.c.l.bf16 %v575
        %v592 = vld [vmem:[%s245] sm:$0xff]
        %v593 = vld [vmem:[%s245 + $0x8] sm:$0xff]
        %v594 = vld [vmem:[%s245 + $0x10] sm:$0xff]
        %v595 = vld [vmem:[%s245 + $0x18] sm:$0xff]
        %v596 = vld [vmem:[%s245 + $0x20] sm:$0xff]
        %v597 = vld [vmem:[%s245 + $0x28] sm:$0xff]
        %v598 = vld [vmem:[%s245 + $0x30] sm:$0xff]
        %v599 = vld [vmem:[%s245 + $0x38] sm:$0xff]
        %v600 = vld [vmem:[%s245 + $0x40] sm:$0xff]
        %v601 = vld [vmem:[%s245 + $0x48] sm:$0xff]
        %v602 = vld [vmem:[%s245 + $0x50] sm:$0xff]
        %v603 = vld [vmem:[%s245 + $0x58] sm:$0xff]
        %v604 = vld [vmem:[%s245 + $0x60] sm:$0xff]
        %v605 = vld [vmem:[%s245 + $0x68] sm:$0xff]
        %v606 = vld [vmem:[%s245 + $0x70] sm:$0xff]
        %v607 = vld [vmem:[%s245 + $0x78] sm:$0xff]
        %v624 = vunpack.c.l.b16 %v540
        %v625 = vunpack.c.l.b16 %v541
        %v626 = vunpack.c.l.b16 %v542
        %v627 = vunpack.c.l.b16 %v543
        %v628 = vunpack.c.l.b16 %v544
        %v629 = vunpack.c.l.b16 %v545
        %v630 = vunpack.c.l.b16 %v546
        %v631 = vunpack.c.l.b16 %v547
        %v632 = vunpack.c.l.b16 %v548
        %v633 = vunpack.c.l.b16 %v549
        %v634 = vunpack.c.l.b16 %v550
        %v635 = vunpack.c.l.b16 %v551
        %v636 = vunpack.c.l.b16 %v552
        %v637 = vunpack.c.l.b16 %v553
        %v638 = vunpack.c.l.b16 %v554
        %v639 = vunpack.c.l.b16 %v555
        %v640 = vpack.c.b16 %v625, %v624
        %v641 = vpack.c.b16 %v627, %v626
        %v642 = vpack.c.b16 %v629, %v628
        %v643 = vpack.c.b16 %v631, %v630
        %v644 = vpack.c.b16 %v633, %v632
        %v645 = vpack.c.b16 %v635, %v634
        %v646 = vpack.c.b16 %v637, %v636
        %v647 = vpack.c.b16 %v639, %v638
        %656 = vmatpush.bf16.msra.mxu0 %v647
        %657 = vmatpush.bf16.msra.mxu0 %v646
        %658 = vmatpush.bf16.msra.mxu0 %v645
        %659 = vmatpush.bf16.msra.mxu0 %v644
        %660 = vmatpush.bf16.msra.mxu0 %v643
        %661 = vmatpush.bf16.msra.mxu0 %v642
        %662 = vmatpush.bf16.msra.mxu0 %v641
        %663 = vmatpush.bf16.msra.mxu0 %v640
        %664 = vmatmul.bf16.gmra.mxu0 %v532
        %v665 = vpop.f32.mrf.mxu0
        %v666 = vadd.f32 %v576, %v665
        %v667 = vpop.f32.mrf.mxu0
        %v668 = vadd.f32 %v577, %v667
        %669 = vmatmul.bf16.gmra.mxu0 %v533
        %v670 = vpop.f32.mrf.mxu0
        %v671 = vadd.f32 %v578, %v670
        %v672 = vpop.f32.mrf.mxu0
        %v673 = vadd.f32 %v579, %v672
        %674 = vmatmul.bf16.gmra.mxu0 %v534
        %v675 = vpop.f32.mrf.mxu0
        %v676 = vadd.f32 %v580, %v675
        %v677 = vpop.f32.mrf.mxu0
        %v678 = vadd.f32 %v581, %v677
        %679 = vmatmul.bf16.gmra.mxu0 %v535
        %v680 = vpop.f32.mrf.mxu0
        %v681 = vadd.f32 %v582, %v680
        %v682 = vpop.f32.mrf.mxu0
        %v683 = vadd.f32 %v583, %v682
        %684 = vmatmul.bf16.gmra.mxu0 %v536
        %v685 = vpop.f32.mrf.mxu0
        %v686 = vadd.f32 %v584, %v685
        %v687 = vpop.f32.mrf.mxu0
        %v688 = vadd.f32 %v585, %v687
        %689 = vmatmul.bf16.gmra.mxu0 %v537
        %v690 = vpop.f32.mrf.mxu0
        %v691 = vadd.f32 %v586, %v690
        %v692 = vpop.f32.mrf.mxu0
        %v693 = vadd.f32 %v587, %v692
        %694 = vmatmul.bf16.gmra.mxu0 %v538
        %v695 = vpop.f32.mrf.mxu0
        %v696 = vadd.f32 %v588, %v695
        %v697 = vpop.f32.mrf.mxu0
        %v698 = vadd.f32 %v589, %v697
        %699 = vmatmul.bf16.gmra.mxu0 %v539
        %v700 = vpop.f32.mrf.mxu0
        %v701 = vadd.f32 %v590, %v700
        %v702 = vpop.f32.mrf.mxu0
        %v703 = vadd.f32 %v591, %v702
        %704 = vdwg.mxu0
        %706 = vset.pattern.permute.xlu0 0
        %707 = vperm.xlu0 %706, %v592
        %v708 = vpop.permute.xlu0 %707
        %711 = vset.pattern.permute.xlu0 0
        %712 = vperm.xlu0 %711, %v593
        %v713 = vpop.permute.xlu0 %712
        %716 = vset.pattern.permute.xlu0 0
        %717 = vperm.xlu0 %716, %v594
        %v718 = vpop.permute.xlu0 %717
        %721 = vset.pattern.permute.xlu0 0
        %722 = vperm.xlu0 %721, %v595
        %v723 = vpop.permute.xlu0 %722
        %726 = vset.pattern.permute.xlu0 0
        %727 = vperm.xlu0 %726, %v596
        %v728 = vpop.permute.xlu0 %727
        %731 = vset.pattern.permute.xlu0 0
        %732 = vperm.xlu0 %731, %v597
        %v733 = vpop.permute.xlu0 %732
        %736 = vset.pattern.permute.xlu0 0
        %737 = vperm.xlu0 %736, %v598
        %v738 = vpop.permute.xlu0 %737
        %741 = vset.pattern.permute.xlu0 0
        %742 = vperm.xlu0 %741, %v599
        %v743 = vpop.permute.xlu0 %742
        %746 = vset.pattern.permute.xlu0 0
        %747 = vperm.xlu0 %746, %v600
        %v748 = vpop.permute.xlu0 %747
        %751 = vset.pattern.permute.xlu0 0
        %752 = vperm.xlu0 %751, %v601
        %v753 = vpop.permute.xlu0 %752
        %756 = vset.pattern.permute.xlu0 0
        %757 = vperm.xlu0 %756, %v602
        %v758 = vpop.permute.xlu0 %757
        %761 = vset.pattern.permute.xlu0 0
        %762 = vperm.xlu0 %761, %v603
        %v763 = vpop.permute.xlu0 %762
        %766 = vset.pattern.permute.xlu0 0
        %767 = vperm.xlu0 %766, %v604
        %v768 = vpop.permute.xlu0 %767
        %771 = vset.pattern.permute.xlu0 0
        %772 = vperm.xlu0 %771, %v605
        %v773 = vpop.permute.xlu0 %772
        %776 = vset.pattern.permute.xlu0 0
        %777 = vperm.xlu0 %776, %v606
        %v778 = vpop.permute.xlu0 %777
        %781 = vset.pattern.permute.xlu0 0
        %782 = vperm.xlu0 %781, %v607
        %v783 = vpop.permute.xlu0 %782
        %v785 = vmul.f32 %v708, %v666
        %v786 = vmul.f32 %v713, %v668
        %v787 = vmul.f32 %v718, %v671
        %v788 = vmul.f32 %v723, %v673
        %v789 = vmul.f32 %v728, %v676
        %v790 = vmul.f32 %v733, %v678
        %v791 = vmul.f32 %v738, %v681
        %v792 = vmul.f32 %v743, %v683
        %v793 = vmul.f32 %v748, %v686
        %v794 = vmul.f32 %v753, %v688
        %v795 = vmul.f32 %v758, %v691
        %v796 = vmul.f32 %v763, %v693
        %v797 = vmul.f32 %v768, %v696
        %v798 = vmul.f32 %v773, %v698
        %v799 = vmul.f32 %v778, %v701
        %v800 = vmul.f32 %v783, %v703
        %v801 = vld [vmem:[%s254] sm:$0x1]
        %v803 = vperm.slane %v801, 0
        %v805 = vadd.f32 %v785, %v803
        %v806 = vadd.f32 %v786, %v803
        %v807 = vadd.f32 %v787, %v803
        %v808 = vadd.f32 %v788, %v803
        %v809 = vadd.f32 %v789, %v803
        %v810 = vadd.f32 %v790, %v803
        %v811 = vadd.f32 %v791, %v803
        %v812 = vadd.f32 %v792, %v803
        %v813 = vadd.f32 %v793, %v803
        %v814 = vadd.f32 %v794, %v803
        %v815 = vadd.f32 %v795, %v803
        %v816 = vadd.f32 %v796, %v803
        %v817 = vadd.f32 %v797, %v803
        %v818 = vadd.f32 %v798, %v803
        %v819 = vadd.f32 %v799, %v803
        %v820 = vadd.f32 %v800, %v803
        %p821 = scmp.lt.s32.totalorder %s22, 1
        // Predicated region
        $region53: #{tpu_custom_call.1} parent=35 // pred_check
          %p822 = pneg %p821
        $region54: #{tpu_custom_call.1} parent=35 // pred_check_branch
          %824 = sbr.rel (%p822) target = $region56
        $region55: #{tpu_custom_call.1} parent=35 // pred_region
          %v825 = vmax.f32 %v805, 0.0
          %v826 = vmax.f32 %v806, 0.0
          %v827 = vmax.f32 %v807, 0.0
          %v828 = vmax.f32 %v808, 0.0
          %v829 = vmax.f32 %v809, 0.0
          %v830 = vmax.f32 %v810, 0.0
          %v831 = vmax.f32 %v811, 0.0
          %v832 = vmax.f32 %v812, 0.0
          %v833 = vmax.f32 %v813, 0.0
          %v834 = vmax.f32 %v814, 0.0
          %v835 = vmax.f32 %v815, 0.0
          %v836 = vmax.f32 %v816, 0.0
          %v837 = vmax.f32 %v817, 0.0
          %v838 = vmax.f32 %v818, 0.0
          %v839 = vmax.f32 %v819, 0.0
          %v840 = vmax.f32 %v820, 0.0
          %v841 = vmul.f32 %v708, %v825
          %v842 = vmul.f32 %v713, %v826
          %v843 = vmul.f32 %v718, %v827
          %v844 = vmul.f32 %v723, %v828
          %v845 = vmul.f32 %v728, %v829
          %v846 = vmul.f32 %v733, %v830
          %v847 = vmul.f32 %v738, %v831
          %v848 = vmul.f32 %v743, %v832
          %v849 = vmul.f32 %v748, %v833
          %v850 = vmul.f32 %v753, %v834
          %v851 = vmul.f32 %v758, %v835
          %v852 = vmul.f32 %v763, %v836
          %v853 = vmul.f32 %v768, %v837
          %v854 = vmul.f32 %v773, %v838
          %v855 = vmul.f32 %v778, %v839
          %v856 = vmul.f32 %v783, %v840
          %v857 = vpack.c.bf16 %v841, %v841
          %v858 = vpack.c.bf16 %v842, %v842
          %v859 = vpack.c.bf16 %v843, %v843
          %v860 = vpack.c.bf16 %v844, %v844
          %v861 = vpack.c.bf16 %v845, %v845
          %v862 = vpack.c.bf16 %v846, %v846
          %v863 = vpack.c.bf16 %v847, %v847
          %v864 = vpack.c.bf16 %v848, %v848
          %v865 = vpack.c.bf16 %v849, %v849
          %v866 = vpack.c.bf16 %v850, %v850
          %v867 = vpack.c.bf16 %v851, %v851
          %v868 = vpack.c.bf16 %v852, %v852
          %v869 = vpack.c.bf16 %v853, %v853
          %v870 = vpack.c.bf16 %v854, %v854
          %v871 = vpack.c.bf16 %v855, %v855
          %v872 = vpack.c.bf16 %v856, %v856
          %s873 = smul.addr %s556, 4
          %s874 = scalar_lea.vmem [#allocation2], %s873
          %875 = vst [vmem:[%s874] sm:$0xf] %v857
          %876 = vst [vmem:[%s874 + $0x4] sm:$0xf] %v858
          %877 = vst [vmem:[%s874 + $0x8] sm:$0xf] %v859
          %878 = vst [vmem:[%s874 + $0xc] sm:$0xf] %v860
          %879 = vst [vmem:[%s874 + $0x10] sm:$0xf] %v861
          %880 = vst [vmem:[%s874 + $0x14] sm:$0xf] %v862
          %881 = vst [vmem:[%s874 + $0x18] sm:$0xf] %v863
          %882 = vst [vmem:[%s874 + $0x1c] sm:$0xf] %v864
          %883 = vst [vmem:[%s874 + $0x20] sm:$0xf] %v865
          %884 = vst [vmem:[%s874 + $0x24] sm:$0xf] %v866
          %885 = vst [vmem:[%s874 + $0x28] sm:$0xf] %v867
          %886 = vst [vmem:[%s874 + $0x2c] sm:$0xf] %v868
          %887 = vst [vmem:[%s874 + $0x30] sm:$0xf] %v869
          %888 = vst [vmem:[%s874 + $0x34] sm:$0xf] %v870
          %889 = vst [vmem:[%s874 + $0x38] sm:$0xf] %v871
          %890 = vst [vmem:[%s874 + $0x3c] sm:$0xf] %v872
        $region56: #{tpu_custom_call.1} parent=35 // pred_fallthru
          _
        %p891 = scmp.eq.s32.totalorder %s22, 1
        // Predicated region
        $region57: #{tpu_custom_call.1} parent=35 // pred_check
          %p892 = pneg %p891
        $region58: #{tpu_custom_call.1} parent=35 // pred_check_branch
          %894 = sbr.rel (%p892) target = $region60
        $region59: #{tpu_custom_call.1} parent=35 // pred_region
          %895 = vst [vmem:[#allocation8] sm:$0xff] %v805
          %896 = vst [vmem:[#allocation8 + $0x8] sm:$0xff] %v806
          %897 = vst [vmem:[#allocation8 + $0x10] sm:$0xff] %v807
          %898 = vst [vmem:[#allocation8 + $0x18] sm:$0xff] %v808
          %899 = vst [vmem:[#allocation8 + $0x20] sm:$0xff] %v809
          %900 = vst [vmem:[#allocation8 + $0x28] sm:$0xff] %v810
          %901 = vst [vmem:[#allocation8 + $0x30] sm:$0xff] %v811
          %902 = vst [vmem:[#allocation8 + $0x38] sm:$0xff] %v812
          %903 = vst [vmem:[#allocation8 + $0x40] sm:$0xff] %v813
          %904 = vst [vmem:[#allocation8 + $0x48] sm:$0xff] %v814
          %905 = vst [vmem:[#allocation8 + $0x50] sm:$0xff] %v815
          %906 = vst [vmem:[#allocation8 + $0x58] sm:$0xff] %v816
          %907 = vst [vmem:[#allocation8 + $0x60] sm:$0xff] %v817
          %908 = vst [vmem:[#allocation8 + $0x68] sm:$0xff] %v818
          %909 = vst [vmem:[#allocation8 + $0x70] sm:$0xff] %v819
          %910 = vst [vmem:[#allocation8 + $0x78] sm:$0xff] %v820
        $region60: #{tpu_custom_call.1} parent=35 // pred_fallthru
          _
        // Predicated region
        $region61: #{tpu_custom_call.1} parent=35 // pred_check
          %p911 = pneg %p147
        $region62: #{tpu_custom_call.1} parent=35 // pred_check_branch
          %913 = sbr.rel (%p911) target = $region64
        $region63: #{tpu_custom_call.1} parent=35 // pred_region
          %s914 = smul.u32 16, %s23
          %916 = vsyncadd [#allocation7], 0
          %s917 = smul.addr %s914, 8
          %s918 = scalar_lea.hbm %s5, %s917
          %s919 = sshll.u32 [#allocation8], 4
          %s920 = int_to_ptr.vmem [resolvable:$true] %s919
          %s921 = sshll.u32 %s918, 4
          %s922 = int_to_ptr.hbm [resolvable:$true] %s921
          %927 = dma.vmem_to_hbm [thread:$0]  %s920, 2048, %s922, [#allocation7], 128, 128, 8
        $region64: #{tpu_custom_call.1} parent=35 // pred_fallthru
          _
        // Predicated region
        $region65: #{tpu_custom_call.1} parent=35 // pred_check
          %p928 = pneg %p147
        $region66: #{tpu_custom_call.1} parent=35 // pred_check_branch
          %930 = sbr.rel (%p928) target = $region68
        $region67: #{tpu_custom_call.1} parent=35 // pred_region
          %932 = dma.done [#allocation7], 2048
        $region68: #{tpu_custom_call.1} parent=35 // pred_fallthru
          _
      $region36: #{tpu_custom_call.1} parent=5 // pred_fallthru
        _
      %p933 = scmp.le.s32.totalorder 2, %s13
      // Predicated region
      $region69: #{tpu_custom_call.1} parent=5 // pred_check
        %p934 = pneg %p933
      $region70: #{tpu_custom_call.1} parent=5 // pred_check_branch
        %936 = sbr.rel (%p934) target = $region72
      $region71: #{tpu_custom_call.1} parent=5 // pred_region
        %s937 = ssub.s32 %s13, 2
      $region72: #{tpu_custom_call.1} parent=5 // pred_fallthru
        _
    $region6: #{tpu_custom_call.1} parent=1 // loop_footer
      %s17 = sadd.s32 1, %s13
    $region7: #{tpu_custom_call.1} parent=1 // loop_footer_branch
      %12 = sbr.rel target = $region3
    $region8: #{tpu_custom_call.1} parent=1 // loop_exit
      _
    %938 = vsyncpa [#allocation6], 1
    %s939 = scalar_lea.sflag [#allocation6], 1
    %940 = vsyncpa %s939, 1
    %941 = vsyncpa [#allocation7], 1
    %s942 = scalar_lea.sflag [#allocation7], 1
    %943 = vsyncpa %s942, 1
  %944 = vsyncmov [#allocation4]
  %s945 = vpop.sfrf %944
  %p946 = scmp.eq.s32.totalorder %s945, 0
  %p947 = pneg %p946
  %949 = shalt.err (%p947)

</llo_original>
